<compile_context>
chip_gen: v7x
topology: tpu7x:2x2x1
jax: 0.10.0
libtpu: 0.0.40
codegen_flags: <defaults>
</compile_context>

<pallas_src>
import jax
import jax.numpy as jnp
from jax.experimental import pallas as pl
from jax.experimental.pallas import tpu as pltpu

# ---- hyperparameters mirroring the PyTorch module ----
IMAGE_W = 5
KER_W = 3
TARGET = 1
CHANNELS = 4
LOCAL_STEPS = 2
NUMPROCS = 1                       # single-process analogue of MPI.COMM_WORLD
NSTEPS = LOCAL_STEPS * NUMPROCS    # number of StepLayers in the LayerParallel chain
TF = 1.0
DT = TF / NSTEPS                   # torchbraid forward-Euler step size

N = 2                              # batch
CIN = 3
H = W = IMAGE_W
HP = H + 2                         # conv halo rows            -> 7
WPAD = 8                           # padded row width          -> 8
PP = HP * WPAD                     # padded pixels per sample  -> 56
LANES = N * PP                     # live pixel lanes          -> 112
LANES_PAD = 128                    # one full lane tile
CPAD = 8                           # channel dim padded to one sublane tile
KTAPS = KER_W * KER_W              # 9
# lane offset of input tap (dy, dx) relative to the output pixel, dy-major order
DELTAS = tuple((dy - 1) * WPAD + (dx - 1)
               for dy in range(KER_W) for dx in range(KER_W))

# packed-parameter slab column offsets (each logical piece starts on a 128-lane boundary)
OFF_MASK = 0                       # (8,128) interior-pixel mask, all sublanes
OFF_WFC = 128                      # (8,128) fc-weight planes (zero on halo/pad lanes)
OFF_W = (256, 384, 512)            # im2col weight (8,72) at OFF_W[k], bias column at +72
OFF_BFC = 640                      # fc bias scalar at [0, OFF_BFC]
PCOLS = 768

# roll-wraparound safety: every tap of every *interior* output lane stays inside [0, 128),
# so pltpu.roll wraparound only ever feeds masked halo / pad lanes.
_MIN_INTERIOR_LANE = 1 * WPAD + 1                      # 9
_MAX_INTERIOR_LANE = (N - 1) * PP + H * WPAD + W       # 101
assert _MIN_INTERIOR_LANE + min(DELTAS) >= 0
assert _MAX_INTERIOR_LANE + max(DELTAS) < LANES_PAD
assert LANES <= LANES_PAD


def parallelnet_kernel(x_ref, p_ref, sel_ref, out_ref):
    mask8 = p_ref[:, OFF_MASK:OFF_MASK + LANES_PAD]      # (8,128) 1 interior, 0 halo/pad
    wfc = p_ref[:, OFF_WFC:OFF_WFC + LANES_PAD]          # (8,128) fc planes, 0 on halo/pad

    def conv3x3(src, off):
        """3x3 conv (padding=1) on the lane-dense single-tile layout: 8 rolls + one dot."""
        w_mat = p_ref[:, off:off + KTAPS * CPAD]                         # (8, 72)
        b_col = p_ref[:, off + KTAPS * CPAD:off + KTAPS * CPAD + 1]      # (8, 1)
        taps = [src if d == 0 else
                pltpu.roll(src, shift=(-d) % LANES_PAD, axis=1)          # tap[L] = src[L+d]
                for d in DELTAS]
        patches = jnp.concatenate(taps, axis=0)                          # (72, 128)
        return jnp.dot(w_mat, patches,
                       preferred_element_type=jnp.float32) + b_col       # (8, 128)

    x = x_ref[...]                                                        # (8, 128)
    # OpenLayer: relu(conv(x)); halo re-zeroed so the next conv sees padding=1 zeros.
    h = mask8 * jnp.maximum(conv3x3(x, OFF_W[0]), 0.0)
    # LayerParallel (max_levels=max_iters=1) == serial forward Euler:
    #   x <- x + dt*relu(conv_k(x)); dt is pre-folded into w_k, b_k (dt*relu(z)=relu(dt*z)).
    h = h + mask8 * jnp.maximum(conv3x3(h, OFF_W[1]), 0.0)
    h = h + jnp.maximum(conv3x3(h, OFF_W[2]), 0.0)        # no mask: wfc kills halo lanes

    # CloseLayer: flatten + Linear(C*5*5 -> 1) == multiply by fc planes, sum channels,
    # then one selector dot over lanes -> lane-dense (1,128) output row (+ fc bias).
    prod = h * wfc                                                        # (8, 128)
    colsum = jnp.sum(prod, axis=0, keepdims=True)                         # (1, 128)
    out_row = jnp.dot(colsum, sel_ref[...],
                      preferred_element_type=jnp.float32)                 # (1, 128)
    out_ref[...] = out_row + p_ref[0:1, OFF_BFC:OFF_BFC + 1]


def prepare_inputs(params):
    """One-time parameter re-layout (hoisted out of the forward path)."""
    wo, bo, w1, b1, w2, b2, wfc, bfc = params

    def conv_w_cols(wt, b, scale):
        # torch (cout,cin,kh,kw) -> (8, 73): tap-major cin-minor im2col mat + bias column,
        # pre-scaled by `scale` (dt folding for the step layers).
        cout, cin = wt.shape[0], wt.shape[1]
        w = jnp.transpose(wt.astype(jnp.float32) * scale, (0, 2, 3, 1))   # (cout,3,3,cin)
        w = jnp.pad(w, ((0, CPAD - cout), (0, 0), (0, 0), (0, CPAD - cin)))
        w = w.reshape(CPAD, KTAPS * CPAD)                                  # (8, 72)
        bcol = jnp.pad(b.astype(jnp.float32) * scale, (0, CPAD - cout)).reshape(CPAD, 1)
        return jnp.concatenate([w, bcol], axis=1)                          # (8, 73)

    # interior mask in the padded pixel layout, pre-broadcast to all 8 sublanes
    mrow = jnp.pad(jnp.ones((1, H, W), jnp.float32), ((0, 0), (1, 1), (1, WPAD - W - 1)))
    mrow = jnp.pad(jnp.tile(mrow.reshape(1, PP), (1, N)), ((0, 0), (0, LANES_PAD - LANES)))
    mask8 = jnp.tile(mrow, (CPAD, 1))                                      # (8, 128)

    # torch fc weight (1, C*H*W), index c*25 + h*5 + w -> per-channel spatial planes,
    # zero at halo/pad, replicated for both samples along the lane axis.
    wfc_img = wfc.reshape(CHANNELS, H, W).astype(jnp.float32)
    wfc_pl = jnp.pad(wfc_img, ((0, CPAD - CHANNELS), (1, 1), (1, WPAD - W - 1)))
    wfc_pl = jnp.pad(jnp.tile(wfc_pl.reshape(CPAD, PP), (1, N)),
                     ((0, 0), (0, LANES_PAD - LANES)))                     # (8, 128)

    packed = jnp.zeros((CPAD, PCOLS), jnp.float32)
    packed = packed.at[:, OFF_MASK:OFF_MASK + LANES_PAD].set(mask8)
    packed = packed.at[:, OFF_WFC:OFF_WFC + LANES_PAD].set(wfc_pl)
    packed = packed.at[:, OFF_W[0]:OFF_W[0] + KTAPS * CPAD + 1].set(conv_w_cols(wo, bo, 1.0))
    packed = packed.at[:, OFF_W[1]:OFF_W[1] + KTAPS * CPAD + 1].set(conv_w_cols(w1, b1, DT))
    packed = packed.at[:, OFF_W[2]:OFF_W[2] + KTAPS * CPAD + 1].set(conv_w_cols(w2, b2, DT))
    packed = packed.at[0, OFF_BFC].set(bfc[0])

    # per-sample 0/1 lane selector; only the first N columns are meaningful.
    sel = jnp.zeros((LANES_PAD, LANES_PAD), jnp.float32)
    for n in range(N):
        sel = sel.at[n * PP:(n + 1) * PP, n].set(1.0)
    return packed, sel


def parallelnet_forward(x_nchw, packed, sel):
    # per-call glue: only the activation relayout (channels->sublanes, pixels->lanes).
    x = jnp.transpose(x_nchw, (1, 0, 2, 3)).astype(jnp.float32)            # (CIN, N, H, W)
    x = jnp.pad(x, ((0, CPAD - CIN), (0, 0), (1, 1), (1, WPAD - W - 1)))    # (8, N, 7, 8)
    x_lanes = jnp.pad(x.reshape(CPAD, LANES), ((0, 0), (0, LANES_PAD - LANES)))  # (8, 128)

    vmem = pl.BlockSpec(memory_space=pltpu.MemorySpace.VMEM)
    out_row = pl.pallas_call(
        parallelnet_kernel,
        out_shape=jax.ShapeDtypeStruct((1, LANES_PAD), jnp.float32),
        in_specs=[vmem, vmem, vmem],
        out_specs=vmem,
    )(x_lanes, packed, sel)
    # lane-dense (1,128) row -> (N, TARGET); assumes TARGET == 1.
    return out_row[:, :N].T


def ref_forward(x, params):
    """Pure-JAX reference with PyTorch (NCHW) semantics."""
    wo, bo, w1, b1, w2, b2, wfc, bfc = params

    def conv(h, wt, b):
        y = jax.lax.conv_general_dilated(h, wt, (1, 1), ((1, 1), (1, 1)),
                                         dimension_numbers=('NCHW', 'OIHW', 'NCHW'))
        return y + b[None, :, None, None]

    h = jax.nn.relu(conv(x, wo, bo))
    h = h + DT * jax.nn.relu(conv(h, w1, b1))
    h = h + DT * jax.nn.relu(conv(h, w2, b2))
    flat = h.reshape(N, -1)          # == torch.flatten(x, 1) on NCHW
    return flat @ wfc.T + bfc[None, :]


def init_params(key):
    ks = jax.random.split(key, 8)

    def u(k, shape, fan_in):
        b = 1.0 / jnp.sqrt(jnp.float32(fan_in))
        return jax.random.uniform(k, shape, jnp.float32, -b, b)

    wo = u(ks[0], (CHANNELS, CIN, KER_W, KER_W), CIN * KER_W * KER_W)
    bo = u(ks[1], (CHANNELS,), CIN * KER_W * KER_W)
    w1 = u(ks[2], (CHANNELS, CHANNELS, KER_W, KER_W), CHANNELS * KER_W * KER_W)
    b1 = u(ks[3], (CHANNELS,), CHANNELS * KER_W * KER_W)
    w2 = u(ks[4], (CHANNELS, CHANNELS, KER_W, KER_W), CHANNELS * KER_W * KER_W)
    b2 = u(ks[5], (CHANNELS,), CHANNELS * KER_W * KER_W)
    wfc = u(ks[6], (TARGET, CHANNELS * H * W), CHANNELS * H * W)
    bfc = u(ks[7], (TARGET,), CHANNELS * H * W)
    return (wo, bo, w1, b1, w2, b2, wfc, bfc)


if __name__ == "__main__":
    key = jax.random.PRNGKey(0)
    kx, kp = jax.random.split(key)
    x = jax.random.normal(kx, (N, CIN, H, W), jnp.float32)   # NCHW, like PyTorch
    params = init_params(kp)

    # one-time parameter packing (hoisted out of the steady-state forward path)
    packed, sel = prepare_inputs(params)

    fwd = jax.jit(parallelnet_forward)
    out = jax.block_until_ready(fwd(x, packed, sel))

    ref = ref_forward(x, params)
    assert out.shape == (N, TARGET)
    assert jnp.allclose(out, ref, rtol=1e-4, atol=1e-4), (out, ref)
    # TODO(synk): MPI rank plumbing / torchbraid MGRIT iterations (max_levels>1) and the
    # copyParameterGradToRoot gradient-gather helper have no single-device Pallas
    # equivalent; with max_levels=max_iters=1 the forward pass reduces to the serial
    # Euler chain implemented above.
    print("KERNEL_OK")
</pallas_src>

<mosaic_0001>
module attributes {stable_mosaic.version = 11 : i64} {
  func.func @parallelnet_kernel(%arg0: memref<8x128xf32, #tpu.memory_space<vmem>>, %arg1: memref<8x768xf32, #tpu.memory_space<vmem>>, %arg2: memref<128x128xf32, #tpu.memory_space<vmem>>, %arg3: memref<1x128xf32, #tpu.memory_space<vmem>>) attributes {dimension_semantics = [], scalar_prefetch = 0 : i64, scratch_operands = 0 : i64, tpu.core_type = #tpu.core_type<tc>} {
    %c0 = arith.constant 0 : index
    %c0_0 = arith.constant 0 : index
    %0 = vector.load %arg1[%c0, %c0_0] : memref<8x768xf32, #tpu.memory_space<vmem>>, vector<8x128xf32>
    %c0_1 = arith.constant 0 : index
    %c128 = arith.constant 128 : index
    %1 = vector.load %arg1[%c0_1, %c128] : memref<8x768xf32, #tpu.memory_space<vmem>>, vector<8x128xf32>
    %c0_2 = arith.constant 0 : index
    %c0_3 = arith.constant 0 : index
    %2 = vector.load %arg0[%c0_2, %c0_3] : memref<8x128xf32, #tpu.memory_space<vmem>>, vector<8x128xf32>
    %c0_4 = arith.constant 0 : index
    %c256 = arith.constant 256 : index
    %3 = vector.load %arg1[%c0_4, %c256] : memref<8x768xf32, #tpu.memory_space<vmem>>, vector<8x72xf32>
    %c0_5 = arith.constant 0 : index
    %c328 = arith.constant 328 : index
    %4 = vector.load %arg1[%c0_5, %c328] : memref<8x768xf32, #tpu.memory_space<vmem>>, vector<8x1xf32>
    %c9_i32 = arith.constant 9 : i32
    %5 = tpu.dynamic_rotate %2 by %c9_i32 dim 1 : vector<8x128xf32>, i32 -> vector<8x128xf32>
    %c8_i32 = arith.constant 8 : i32
    %6 = tpu.dynamic_rotate %2 by %c8_i32 dim 1 : vector<8x128xf32>, i32 -> vector<8x128xf32>
    %c7_i32 = arith.constant 7 : i32
    %7 = tpu.dynamic_rotate %2 by %c7_i32 dim 1 : vector<8x128xf32>, i32 -> vector<8x128xf32>
    %c1_i32 = arith.constant 1 : i32
    %8 = tpu.dynamic_rotate %2 by %c1_i32 dim 1 : vector<8x128xf32>, i32 -> vector<8x128xf32>
    %c127_i32 = arith.constant 127 : i32
    %9 = tpu.dynamic_rotate %2 by %c127_i32 dim 1 : vector<8x128xf32>, i32 -> vector<8x128xf32>
    %c121_i32 = arith.constant 121 : i32
    %10 = tpu.dynamic_rotate %2 by %c121_i32 dim 1 : vector<8x128xf32>, i32 -> vector<8x128xf32>
    %c120_i32 = arith.constant 120 : i32
    %11 = tpu.dynamic_rotate %2 by %c120_i32 dim 1 : vector<8x128xf32>, i32 -> vector<8x128xf32>
    %c119_i32 = arith.constant 119 : i32
    %12 = tpu.dynamic_rotate %2 by %c119_i32 dim 1 : vector<8x128xf32>, i32 -> vector<8x128xf32>
    %13 = tpu.concatenate %5, %6, %7, %8, %2, %9, %10, %11, %12 in 0 : vector<8x128xf32>, vector<8x128xf32>, vector<8x128xf32>, vector<8x128xf32>, vector<8x128xf32>, vector<8x128xf32>, vector<8x128xf32>, vector<8x128xf32>, vector<8x128xf32> -> vector<72x128xf32>
    %cst = arith.constant dense<0.000000e+00> : vector<8x128xf32>
    %14 = tpu.matmul %3, %13, %cst {dimension_numbers = #tpu.dot_dimension_numbers<[1], [0], [0], [1], [0, 0, 1, 1], [], []>} : vector<8x72xf32>, vector<72x128xf32>, vector<8x128xf32> -> vector<8x128xf32>
    %15 = vector.broadcast %4 : vector<8x1xf32> to vector<8x128xf32>
    %16 = arith.addf %14, %15 : vector<8x128xf32>
    %cst_6 = arith.constant 0.000000e+00 : f32
    %17 = vector.broadcast %cst_6 : f32 to vector<8x128xf32>
    %18 = arith.maximumf %16, %17 : vector<8x128xf32>
    %19 = arith.mulf %0, %18 : vector<8x128xf32>
    %c0_7 = arith.constant 0 : index
    %c384 = arith.constant 384 : index
    %20 = vector.load %arg1[%c0_7, %c384] : memref<8x768xf32, #tpu.memory_space<vmem>>, vector<8x72xf32>
    %c0_8 = arith.constant 0 : index
    %c456 = arith.constant 456 : index
    %21 = vector.load %arg1[%c0_8, %c456] : memref<8x768xf32, #tpu.memory_space<vmem>>, vector<8x1xf32>
    %c9_i32_9 = arith.constant 9 : i32
    %22 = tpu.dynamic_rotate %19 by %c9_i32_9 dim 1 : vector<8x128xf32>, i32 -> vector<8x128xf32>
    %c8_i32_10 = arith.constant 8 : i32
    %23 = tpu.dynamic_rotate %19 by %c8_i32_10 dim 1 : vector<8x128xf32>, i32 -> vector<8x128xf32>
    %c7_i32_11 = arith.constant 7 : i32
    %24 = tpu.dynamic_rotate %19 by %c7_i32_11 dim 1 : vector<8x128xf32>, i32 -> vector<8x128xf32>
    %c1_i32_12 = arith.constant 1 : i32
    %25 = tpu.dynamic_rotate %19 by %c1_i32_12 dim 1 : vector<8x128xf32>, i32 -> vector<8x128xf32>
    %c127_i32_13 = arith.constant 127 : i32
    %26 = tpu.dynamic_rotate %19 by %c127_i32_13 dim 1 : vector<8x128xf32>, i32 -> vector<8x128xf32>
    %c121_i32_14 = arith.constant 121 : i32
    %27 = tpu.dynamic_rotate %19 by %c121_i32_14 dim 1 : vector<8x128xf32>, i32 -> vector<8x128xf32>
    %c120_i32_15 = arith.constant 120 : i32
    %28 = tpu.dynamic_rotate %19 by %c120_i32_15 dim 1 : vector<8x128xf32>, i32 -> vector<8x128xf32>
    %c119_i32_16 = arith.constant 119 : i32
    %29 = tpu.dynamic_rotate %19 by %c119_i32_16 dim 1 : vector<8x128xf32>, i32 -> vector<8x128xf32>
    %30 = tpu.concatenate %22, %23, %24, %25, %19, %26, %27, %28, %29 in 0 : vector<8x128xf32>, vector<8x128xf32>, vector<8x128xf32>, vector<8x128xf32>, vector<8x128xf32>, vector<8x128xf32>, vector<8x128xf32>, vector<8x128xf32>, vector<8x128xf32> -> vector<72x128xf32>
    %cst_17 = arith.constant dense<0.000000e+00> : vector<8x128xf32>
    %31 = tpu.matmul %20, %30, %cst_17 {dimension_numbers = #tpu.dot_dimension_numbers<[1], [0], [0], [1], [0, 0, 1, 1], [], []>} : vector<8x72xf32>, vector<72x128xf32>, vector<8x128xf32> -> vector<8x128xf32>
    %32 = vector.broadcast %21 : vector<8x1xf32> to vector<8x128xf32>
    %33 = arith.addf %31, %32 : vector<8x128xf32>
    %cst_18 = arith.constant 0.000000e+00 : f32
    %34 = vector.broadcast %cst_18 : f32 to vector<8x128xf32>
    %35 = arith.maximumf %33, %34 : vector<8x128xf32>
    %36 = arith.mulf %0, %35 : vector<8x128xf32>
    %37 = arith.addf %19, %36 : vector<8x128xf32>
    %c0_19 = arith.constant 0 : index
    %c512 = arith.constant 512 : index
    %38 = vector.load %arg1[%c0_19, %c512] : memref<8x768xf32, #tpu.memory_space<vmem>>, vector<8x72xf32>
    %c0_20 = arith.constant 0 : index
    %c584 = arith.constant 584 : index
    %39 = vector.load %arg1[%c0_20, %c584] : memref<8x768xf32, #tpu.memory_space<vmem>>, vector<8x1xf32>
    %c9_i32_21 = arith.constant 9 : i32
    %40 = tpu.dynamic_rotate %37 by %c9_i32_21 dim 1 : vector<8x128xf32>, i32 -> vector<8x128xf32>
    %c8_i32_22 = arith.constant 8 : i32
    %41 = tpu.dynamic_rotate %37 by %c8_i32_22 dim 1 : vector<8x128xf32>, i32 -> vector<8x128xf32>
    %c7_i32_23 = arith.constant 7 : i32
    %42 = tpu.dynamic_rotate %37 by %c7_i32_23 dim 1 : vector<8x128xf32>, i32 -> vector<8x128xf32>
    %c1_i32_24 = arith.constant 1 : i32
    %43 = tpu.dynamic_rotate %37 by %c1_i32_24 dim 1 : vector<8x128xf32>, i32 -> vector<8x128xf32>
    %c127_i32_25 = arith.constant 127 : i32
    %44 = tpu.dynamic_rotate %37 by %c127_i32_25 dim 1 : vector<8x128xf32>, i32 -> vector<8x128xf32>
    %c121_i32_26 = arith.constant 121 : i32
    %45 = tpu.dynamic_rotate %37 by %c121_i32_26 dim 1 : vector<8x128xf32>, i32 -> vector<8x128xf32>
    %c120_i32_27 = arith.constant 120 : i32
    %46 = tpu.dynamic_rotate %37 by %c120_i32_27 dim 1 : vector<8x128xf32>, i32 -> vector<8x128xf32>
    %c119_i32_28 = arith.constant 119 : i32
    %47 = tpu.dynamic_rotate %37 by %c119_i32_28 dim 1 : vector<8x128xf32>, i32 -> vector<8x128xf32>
    %48 = tpu.concatenate %40, %41, %42, %43, %37, %44, %45, %46, %47 in 0 : vector<8x128xf32>, vector<8x128xf32>, vector<8x128xf32>, vector<8x128xf32>, vector<8x128xf32>, vector<8x128xf32>, vector<8x128xf32>, vector<8x128xf32>, vector<8x128xf32> -> vector<72x128xf32>
    %cst_29 = arith.constant dense<0.000000e+00> : vector<8x128xf32>
    %49 = tpu.matmul %38, %48, %cst_29 {dimension_numbers = #tpu.dot_dimension_numbers<[1], [0], [0], [1], [0, 0, 1, 1], [], []>} : vector<8x72xf32>, vector<72x128xf32>, vector<8x128xf32> -> vector<8x128xf32>
    %50 = vector.broadcast %39 : vector<8x1xf32> to vector<8x128xf32>
    %51 = arith.addf %49, %50 : vector<8x128xf32>
    %cst_30 = arith.constant 0.000000e+00 : f32
    %52 = vector.broadcast %cst_30 : f32 to vector<8x128xf32>
    %53 = arith.maximumf %51, %52 : vector<8x128xf32>
    %54 = arith.addf %37, %53 : vector<8x128xf32>
    %55 = arith.mulf %54, %1 : vector<8x128xf32>
    %cst_31 = arith.constant dense<0.000000e+00> : vector<128xf32>
    %56 = vector.multi_reduction <add>, %55, %cst_31 [0] : vector<8x128xf32> to vector<128xf32>
    %57 = vector.shape_cast %56 : vector<128xf32> to vector<1x128xf32>
    %c0_32 = arith.constant 0 : index
    %c0_33 = arith.constant 0 : index
    %58 = vector.load %arg2[%c0_32, %c0_33] : memref<128x128xf32, #tpu.memory_space<vmem>>, vector<128x128xf32>
    %cst_34 = arith.constant dense<0.000000e+00> : vector<1x128xf32>
    %59 = tpu.matmul %57, %58, %cst_34 {dimension_numbers = #tpu.dot_dimension_numbers<[1], [0], [0], [1], [0, 0, 1, 1], [], []>} : vector<1x128xf32>, vector<128x128xf32>, vector<1x128xf32> -> vector<1x128xf32>
    %c0_35 = arith.constant 0 : index
    %c640 = arith.constant 640 : index
    %60 = vector.load %arg1[%c0_35, %c640] : memref<8x768xf32, #tpu.memory_space<vmem>>, vector<1x1xf32>
    %61 = vector.broadcast %60 : vector<1x1xf32> to vector<1x128xf32>
    %62 = arith.addf %59, %61 : vector<1x128xf32>
    %c0_36 = arith.constant 0 : index
    %c0_37 = arith.constant 0 : index
    %63 = vector.load %arg3[%c0_36, %c0_37] : memref<1x128xf32, #tpu.memory_space<vmem>>, vector<1x128xf32>
    tpu.vector_store %arg3[%c0_36, %c0_37], %62 {strides = array<i32>} : memref<1x128xf32, #tpu.memory_space<vmem>>, vector<1x128xf32>,
    return
  }
}

</mosaic_0001>

<llo_original>
// kernel: parallelnet_forward.1
$region0: #{parallelnet_forward.1}
  #allocation0 [shape = 'u32[]', space=smem, size = 0x4, offset = 0x4, fixed_abs, tag = 'smem constant byte address 0x4 - core index']
  #allocation1 [shape = 'u32[144,128]{1,0:T(1,128)}', space=vmem, size = 0x12000, scoped, tag = 'internal scratch']
  %s0 = inlined_call_operand.vmem [shape: f32[8,128], index: 0, kind: input, shape index: {}]
  %s1 = inlined_call_operand.vmem [shape: f32[8,768], index: 1, kind: input, shape index: {}]
  %s2 = inlined_call_operand.vmem [shape: f32[128,128], index: 2, kind: input, shape index: {}]
  %s3 = inlined_call_operand.vmem [shape: f32[1,128], index: 3, kind: output, shape index: {}]
  %s4 = sld [smem:[#allocation0]]
  $region22: #{parallelnet_forward.1} parent=0
    _
  %s6 = ssub.s32 1, %s4
  %s7 = scalar_select 0, %s6, %s4
  // Predicated region
  $region2: #{parallelnet_forward.1} parent=0 // pred_check
    _
  $region3: #{parallelnet_forward.1} parent=0 // pred_check_branch
    %9 = sbr.rel (0) target = $region5
  $region4: #{parallelnet_forward.1} parent=0 // pred_region
    _
  $region5: #{parallelnet_forward.1} parent=0 // pred_fallthru
    _
  // Predicated region
  $region6: #{parallelnet_forward.1} parent=0 // pred_check
    _
  $region7: #{parallelnet_forward.1} parent=0 // pred_check_branch
    %11 = sbr.rel (0) target = $region9
  $region8: #{parallelnet_forward.1} parent=0 // pred_region
    _
  $region9: #{parallelnet_forward.1} parent=0 // pred_fallthru
    _
  // Predicated region
  $region10: #{parallelnet_forward.1} parent=0 // pred_check
    _
  $region11: #{parallelnet_forward.1} parent=0 // pred_check_branch
    %13 = sbr.rel (0) target = $region13
  $region12: #{parallelnet_forward.1} parent=0 // pred_region
    _
  $region13: #{parallelnet_forward.1} parent=0 // pred_fallthru
    _
  %v14 = vld [vmem:[%s1] sm:$0xff]
  %v15 = vld [vmem:[%s1 + $0x8] sm:$0xff]
  %v16 = vld [vmem:[%s0] sm:$0xff]
  %v17 = vld [vmem:[%s1 + $0x10] sm:$0xff]
  %18 = vrot.lane.b32.xlu0 %v16, 9
  %v19 = vpop.permute.xlu0 %18
  %20 = vrot.lane.b32.xlu0 %v16, 8
  %v21 = vpop.permute.xlu0 %20
  %22 = vrot.lane.b32.xlu0 %v16, 7
  %v23 = vpop.permute.xlu0 %22
  %24 = vrot.lane.b32.xlu0 %v16, 1
  %v25 = vpop.permute.xlu0 %24
  %26 = vrot.lane.b32.xlu0 %v16, 127
  %v27 = vpop.permute.xlu0 %26
  %28 = vrot.lane.b32.xlu0 %v16, 121
  %v29 = vpop.permute.xlu0 %28
  %30 = vrot.lane.b32.xlu0 %v16, 120
  %v31 = vpop.permute.xlu0 %30
  %32 = vrot.lane.b32.xlu0 %v16, 119
  %v33 = vpop.permute.xlu0 %32
  %35 = vset.pattern.permute.xlu0 72
  %36 = vperm.xlu0 %35, %v17
  %v37 = vpop.permute.xlu0 %36
  %vm39 = vcmask 588800
  %v40 = vsel %vm39, %v17, 0
  %42 = vmatprep.subr.mxu0 0.0
  %43 = vmatpush1.msra.mxu0 %v19
  %44 = vmatprep.subr.mxu0 0.0
  %45 = vmatpush1.msra.mxu0 %v21
  %46 = vmatprep.subr.mxu0 0.0
  %47 = vmatpush1.msra.mxu0 %v23
  %48 = vmatprep.subr.mxu0 0.0
  %49 = vmatpush1.msra.mxu0 %v25
  %50 = vmatprep.subr.mxu0 0.0
  %51 = vmatpush1.msra.mxu0 %v16
  %52 = vmatprep.subr.mxu0 0.0
  %53 = vmatpush1.msra.mxu0 %v27
  %54 = vmatprep.subr.mxu0 0.0
  %55 = vmatpush1.msra.mxu0 %v29
  %56 = vmatprep.subr.mxu0 0.0
  %57 = vmatpush1.msra.mxu0 %v31
  %58 = vmatprep.subr.mxu0 0.0
  %59 = vmatpush1.msra.mxu0 %v33
  %60 = vmatprep.subr.mxu0 0.0
  %61 = vmatpush1.msra.mxu0 0.0
  %62 = vmatprep.subr.mxu0 0.0
  %63 = vmatpush1.msra.mxu0 0.0
  %64 = vmatprep.subr.mxu0 0.0
  %65 = vmatpush1.msra.mxu0 0.0
  %66 = vmatprep.subr.mxu0 0.0
  %67 = vmatpush1.msra.mxu0 0.0
  %68 = vmatprep.subr.mxu0 0.0
  %69 = vmatpush1.msra.mxu0 0.0
  %70 = vmatprep.subr.mxu0 0.0
  %71 = vmatpush1.msra.mxu0 0.0
  %72 = vmatprep.subr.mxu0 0.0
  %73 = vmatpush1.msra.mxu0 0.0
  %74 = vmatprep.subr.mxu0 0.0
  %75 = vmatpush1.msra.mxu0 0.0
  %76 = vmatprep.subr.mxu0 0.0
  %77 = vmatpush1.msra.mxu0 0.0
  %78 = vmatprep.subr.mxu0 0.0
  %79 = vmatpush1.msra.mxu0 0.0
  %80 = vmatprep.subr.mxu0 0.0
  %81 = vmatpush1.msra.mxu0 0.0
  %82 = vmatprep.subr.mxu0 0.0
  %83 = vmatpush1.msra.mxu0 0.0
  %84 = vmatprep.subr.mxu0 0.0
  %85 = vmatpush1.msra.mxu0 0.0
  %86 = vmatprep.subr.mxu0 0.0
  %87 = vmatpush1.msra.mxu0 0.0
  %88 = vmatprep.subr.mxu0 0.0
  %89 = vmatpush1.msra.mxu0 0.0
  %90 = vmatprep.subr.mxu0 0.0
  %91 = vmatpush1.msra.mxu0 0.0
  %92 = vmatprep.subr.mxu0 0.0
  %93 = vmatpush1.msra.mxu0 0.0
  %94 = vmatprep.subr.mxu0 0.0
  %95 = vmatpush1.msra.mxu0 0.0
  %96 = vmatprep.subr.mxu0 0.0
  %97 = vmatpush1.msra.mxu0 0.0
  %98 = vmatprep.subr.mxu0 0.0
  %99 = vmatpush1.msra.mxu0 0.0
  %100 = vmatprep.subr.mxu0 0.0
  %101 = vmatpush1.msra.mxu0 0.0
  %102 = vmatprep.subr.mxu0 0.0
  %103 = vmatpush1.msra.mxu0 0.0
  %104 = vmatprep.subr.mxu0 0.0
  %105 = vmatpush1.msra.mxu0 0.0
  %106 = vmatprep.mubr.f32.mxu0 0.0
  %107 = vmatmul.mubr.f32.gmra.mrb[0].mxu0 %v40
  %v108 = vpop.f32.mrb[0].mxu0
  %v109 = vadd.f32 %v37, %v108
  %v110 = vpop.f32.mrb[0].mxu0
  %111 = vdwg.mxu0
  %v112 = vmax.f32 %v109, 0.0
  %v113 = vmul.f32 %v14, %v112
  %v114 = vld [vmem:[%s1 + $0x18] sm:$0xff]
  %115 = vrot.lane.b32.xlu0 %v113, 9
  %v116 = vpop.permute.xlu0 %115
  %117 = vrot.lane.b32.xlu0 %v113, 8
  %v118 = vpop.permute.xlu0 %117
  %119 = vrot.lane.b32.xlu0 %v113, 7
  %v120 = vpop.permute.xlu0 %119
  %121 = vrot.lane.b32.xlu0 %v113, 1
  %v122 = vpop.permute.xlu0 %121
  %123 = vrot.lane.b32.xlu0 %v113, 127
  %v124 = vpop.permute.xlu0 %123
  %125 = vrot.lane.b32.xlu0 %v113, 121
  %v126 = vpop.permute.xlu0 %125
  %127 = vrot.lane.b32.xlu0 %v113, 120
  %v128 = vpop.permute.xlu0 %127
  %129 = vrot.lane.b32.xlu0 %v113, 119
  %v130 = vpop.permute.xlu0 %129
  %132 = vset.pattern.permute.xlu0 72
  %133 = vperm.xlu0 %132, %v114
  %v134 = vpop.permute.xlu0 %133
  %v136 = vsel %vm39, %v114, 0
  %138 = vmatprep.subr.mxu0 0.0
  %139 = vmatpush1.msra.mxu0 %v116
  %140 = vmatprep.subr.mxu0 0.0
  %141 = vmatpush1.msra.mxu0 %v118
  %142 = vmatprep.subr.mxu0 0.0
  %143 = vmatpush1.msra.mxu0 %v120
  %144 = vmatprep.subr.mxu0 0.0
  %145 = vmatpush1.msra.mxu0 %v122
  %146 = vmatprep.subr.mxu0 0.0
  %147 = vmatpush1.msra.mxu0 %v113
  %148 = vmatprep.subr.mxu0 0.0
  %149 = vmatpush1.msra.mxu0 %v124
  %150 = vmatprep.subr.mxu0 0.0
  %151 = vmatpush1.msra.mxu0 %v126
  %152 = vmatprep.subr.mxu0 0.0
  %153 = vmatpush1.msra.mxu0 %v128
  %154 = vmatprep.subr.mxu0 0.0
  %155 = vmatpush1.msra.mxu0 %v130
  %156 = vmatprep.subr.mxu0 0.0
  %157 = vmatpush1.msra.mxu0 0.0
  %158 = vmatprep.subr.mxu0 0.0
  %159 = vmatpush1.msra.mxu0 0.0
  %160 = vmatprep.subr.mxu0 0.0
  %161 = vmatpush1.msra.mxu0 0.0
  %162 = vmatprep.subr.mxu0 0.0
  %163 = vmatpush1.msra.mxu0 0.0
  %164 = vmatprep.subr.mxu0 0.0
  %165 = vmatpush1.msra.mxu0 0.0
  %166 = vmatprep.subr.mxu0 0.0
  %167 = vmatpush1.msra.mxu0 0.0
  %168 = vmatprep.subr.mxu0 0.0
  %169 = vmatpush1.msra.mxu0 0.0
  %170 = vmatprep.subr.mxu0 0.0
  %171 = vmatpush1.msra.mxu0 0.0
  %172 = vmatprep.subr.mxu0 0.0
  %173 = vmatpush1.msra.mxu0 0.0
  %174 = vmatprep.subr.mxu0 0.0
  %175 = vmatpush1.msra.mxu0 0.0
  %176 = vmatprep.subr.mxu0 0.0
  %177 = vmatpush1.msra.mxu0 0.0
  %178 = vmatprep.subr.mxu0 0.0
  %179 = vmatpush1.msra.mxu0 0.0
  %180 = vmatprep.subr.mxu0 0.0
  %181 = vmatpush1.msra.mxu0 0.0
  %182 = vmatprep.subr.mxu0 0.0
  %183 = vmatpush1.msra.mxu0 0.0
  %184 = vmatprep.subr.mxu0 0.0
  %185 = vmatpush1.msra.mxu0 0.0
  %186 = vmatprep.subr.mxu0 0.0
  %187 = vmatpush1.msra.mxu0 0.0
  %188 = vmatprep.subr.mxu0 0.0
  %189 = vmatpush1.msra.mxu0 0.0
  %190 = vmatprep.subr.mxu0 0.0
  %191 = vmatpush1.msra.mxu0 0.0
  %192 = vmatprep.subr.mxu0 0.0
  %193 = vmatpush1.msra.mxu0 0.0
  %194 = vmatprep.subr.mxu0 0.0
  %195 = vmatpush1.msra.mxu0 0.0
  %196 = vmatprep.subr.mxu0 0.0
  %197 = vmatpush1.msra.mxu0 0.0
  %198 = vmatprep.subr.mxu0 0.0
  %199 = vmatpush1.msra.mxu0 0.0
  %200 = vmatprep.subr.mxu0 0.0
  %201 = vmatpush1.msra.mxu0 0.0
  %202 = vmatprep.mubr.f32.mxu0 0.0
  %203 = vmatmul.mubr.f32.gmra.mrb[0].mxu0 %v136
  %v204 = vpop.f32.mrb[0].mxu0
  %v205 = vadd.f32 %v134, %v204
  %v206 = vpop.f32.mrb[0].mxu0
  %207 = vdwg.mxu0
  %v208 = vmax.f32 %v205, 0.0
  %v209 = vmul.f32 %v14, %v208
  %v210 = vadd.f32 %v113, %v209
  %v211 = vld [vmem:[%s1 + $0x20] sm:$0xff]
  %212 = vrot.lane.b32.xlu0 %v210, 9
  %v213 = vpop.permute.xlu0 %212
  %214 = vrot.lane.b32.xlu0 %v210, 8
  %v215 = vpop.permute.xlu0 %214
  %216 = vrot.lane.b32.xlu0 %v210, 7
  %v217 = vpop.permute.xlu0 %216
  %218 = vrot.lane.b32.xlu0 %v210, 1
  %v219 = vpop.permute.xlu0 %218
  %220 = vrot.lane.b32.xlu0 %v210, 127
  %v221 = vpop.permute.xlu0 %220
  %222 = vrot.lane.b32.xlu0 %v210, 121
  %v223 = vpop.permute.xlu0 %222
  %224 = vrot.lane.b32.xlu0 %v210, 120
  %v225 = vpop.permute.xlu0 %224
  %226 = vrot.lane.b32.xlu0 %v210, 119
  %v227 = vpop.permute.xlu0 %226
  %229 = vset.pattern.permute.xlu0 72
  %230 = vperm.xlu0 %229, %v211
  %v231 = vpop.permute.xlu0 %230
  %v233 = vsel %vm39, %v211, 0
  %235 = vmatprep.subr.mxu0 0.0
  %236 = vmatpush1.msra.mxu0 %v213
  %237 = vmatprep.subr.mxu0 0.0
  %238 = vmatpush1.msra.mxu0 %v215
  %239 = vmatprep.subr.mxu0 0.0
  %240 = vmatpush1.msra.mxu0 %v217
  %241 = vmatprep.subr.mxu0 0.0
  %242 = vmatpush1.msra.mxu0 %v219
  %243 = vmatprep.subr.mxu0 0.0
  %244 = vmatpush1.msra.mxu0 %v210
  %245 = vmatprep.subr.mxu0 0.0
  %246 = vmatpush1.msra.mxu0 %v221
  %247 = vmatprep.subr.mxu0 0.0
  %248 = vmatpush1.msra.mxu0 %v223
  %249 = vmatprep.subr.mxu0 0.0
  %250 = vmatpush1.msra.mxu0 %v225
  %251 = vmatprep.subr.mxu0 0.0
  %252 = vmatpush1.msra.mxu0 %v227
  %253 = vmatprep.subr.mxu0 0.0
  %254 = vmatpush1.msra.mxu0 0.0
  %255 = vmatprep.subr.mxu0 0.0
  %256 = vmatpush1.msra.mxu0 0.0
  %257 = vmatprep.subr.mxu0 0.0
  %258 = vmatpush1.msra.mxu0 0.0
  %259 = vmatprep.subr.mxu0 0.0
  %260 = vmatpush1.msra.mxu0 0.0
  %261 = vmatprep.subr.mxu0 0.0
  %262 = vmatpush1.msra.mxu0 0.0
  %263 = vmatprep.subr.mxu0 0.0
  %264 = vmatpush1.msra.mxu0 0.0
  %265 = vmatprep.subr.mxu0 0.0
  %266 = vmatpush1.msra.mxu0 0.0
  %267 = vmatprep.subr.mxu0 0.0
  %268 = vmatpush1.msra.mxu0 0.0
  %269 = vmatprep.subr.mxu0 0.0
  %270 = vmatpush1.msra.mxu0 0.0
  %271 = vmatprep.subr.mxu0 0.0
  %272 = vmatpush1.msra.mxu0 0.0
  %273 = vmatprep.subr.mxu0 0.0
  %274 = vmatpush1.msra.mxu0 0.0
  %275 = vmatprep.subr.mxu0 0.0
  %276 = vmatpush1.msra.mxu0 0.0
  %277 = vmatprep.subr.mxu0 0.0
  %278 = vmatpush1.msra.mxu0 0.0
  %279 = vmatprep.subr.mxu0 0.0
  %280 = vmatpush1.msra.mxu0 0.0
  %281 = vmatprep.subr.mxu0 0.0
  %282 = vmatpush1.msra.mxu0 0.0
  %283 = vmatprep.subr.mxu0 0.0
  %284 = vmatpush1.msra.mxu0 0.0
  %285 = vmatprep.subr.mxu0 0.0
  %286 = vmatpush1.msra.mxu0 0.0
  %287 = vmatprep.subr.mxu0 0.0
  %288 = vmatpush1.msra.mxu0 0.0
  %289 = vmatprep.subr.mxu0 0.0
  %290 = vmatpush1.msra.mxu0 0.0
  %291 = vmatprep.subr.mxu0 0.0
  %292 = vmatpush1.msra.mxu0 0.0
  %293 = vmatprep.subr.mxu0 0.0
  %294 = vmatpush1.msra.mxu0 0.0
  %295 = vmatprep.subr.mxu0 0.0
  %296 = vmatpush1.msra.mxu0 0.0
  %297 = vmatprep.subr.mxu0 0.0
  %298 = vmatpush1.msra.mxu0 0.0
  %299 = vmatprep.mubr.f32.mxu0 0.0
  %300 = vmatmul.mubr.f32.gmra.mrb[0].mxu0 %v233
  %v301 = vpop.f32.mrb[0].mxu0
  %v302 = vadd.f32 %v231, %v301
  %v303 = vpop.f32.mrb[0].mxu0
  %304 = vdwg.mxu0
  %v305 = vmax.f32 %v302, 0.0
  %v306 = vadd.f32 %v210, %v305
  %v307 = vmul.f32 %v306, %v15
  %v308 = vrot.slane %v307, 4
  %v309 = vadd.f32 %v307, %v308
  %v310 = vrot.slane %v309, 2
  %v311 = vadd.f32 %v309, %v310
  %v312 = vrot.slane %v311, 1
  %v313 = vadd.f32 %v311, %v312
  %v314 = vld [vmem:[%s2] sm:$0xff]
  %v315 = vld [vmem:[%s2 + $0x8] sm:$0xff]
  %v316 = vld [vmem:[%s2 + $0x10] sm:$0xff]
  %v317 = vld [vmem:[%s2 + $0x18] sm:$0xff]
  %v318 = vld [vmem:[%s2 + $0x20] sm:$0xff]
  %v319 = vld [vmem:[%s2 + $0x28] sm:$0xff]
  %v320 = vld [vmem:[%s2 + $0x30] sm:$0xff]
  %v321 = vld [vmem:[%s2 + $0x38] sm:$0xff]
  %v322 = vld [vmem:[%s2 + $0x40] sm:$0xff]
  %v323 = vld [vmem:[%s2 + $0x48] sm:$0xff]
  %v324 = vld [vmem:[%s2 + $0x50] sm:$0xff]
  %v325 = vld [vmem:[%s2 + $0x58] sm:$0xff]
  %v326 = vld [vmem:[%s2 + $0x60] sm:$0xff]
  %v327 = vld [vmem:[%s2 + $0x68] sm:$0xff]
  %v328 = vld [vmem:[%s2 + $0x70] sm:$0xff]
  %v329 = vld [vmem:[%s2 + $0x78] sm:$0xff]
  %v330 = vld [vmem:[%s1 + $0x28] ss:$0 sm:$0xff]
  %332 = vset.pattern.permute.xlu0 0
  %333 = vperm.xlu0 %332, %v330
  %v334 = vpop.permute.xlu0 %333
  %336 = vmatprep.subr.mxu0 0.0
  %337 = vmatpush1.msra.mxu0 %v314
  %338 = vmatprep.subr.mxu0 0.0
  %339 = vmatpush1.msra.mxu0 %v315
  %340 = vmatprep.subr.mxu0 0.0
  %341 = vmatpush1.msra.mxu0 %v316
  %342 = vmatprep.subr.mxu0 0.0
  %343 = vmatpush1.msra.mxu0 %v317
  %344 = vmatprep.subr.mxu0 0.0
  %345 = vmatpush1.msra.mxu0 %v318
  %346 = vmatprep.subr.mxu0 0.0
  %347 = vmatpush1.msra.mxu0 %v319
  %348 = vmatprep.subr.mxu0 0.0
  %349 = vmatpush1.msra.mxu0 %v320
  %350 = vmatprep.subr.mxu0 0.0
  %351 = vmatpush1.msra.mxu0 %v321
  %352 = vmatprep.subr.mxu0 0.0
  %353 = vmatpush1.msra.mxu0 %v322
  %354 = vmatprep.subr.mxu0 0.0
  %355 = vmatpush1.msra.mxu0 %v323
  %356 = vmatprep.subr.mxu0 0.0
  %357 = vmatpush1.msra.mxu0 %v324
  %358 = vmatprep.subr.mxu0 0.0
  %359 = vmatpush1.msra.mxu0 %v325
  %360 = vmatprep.subr.mxu0 0.0
  %361 = vmatpush1.msra.mxu0 %v326
  %362 = vmatprep.subr.mxu0 0.0
  %363 = vmatpush1.msra.mxu0 %v327
  %364 = vmatprep.subr.mxu0 0.0
  %365 = vmatpush1.msra.mxu0 %v328
  %366 = vmatprep.subr.mxu0 0.0
  %367 = vmatpush1.msra.mxu0 %v329
  %368 = vmatprep.subr.mxu0 0.0
  %369 = vmatpush1.msra.mxu0 0.0
  %370 = vmatprep.subr.mxu0 0.0
  %371 = vmatpush1.msra.mxu0 0.0
  %372 = vmatprep.subr.mxu0 0.0
  %373 = vmatpush1.msra.mxu0 0.0
  %374 = vmatprep.subr.mxu0 0.0
  %375 = vmatpush1.msra.mxu0 0.0
  %376 = vmatprep.subr.mxu0 0.0
  %377 = vmatpush1.msra.mxu0 0.0
  %378 = vmatprep.subr.mxu0 0.0
  %379 = vmatpush1.msra.mxu0 0.0
  %380 = vmatprep.subr.mxu0 0.0
  %381 = vmatpush1.msra.mxu0 0.0
  %382 = vmatprep.subr.mxu0 0.0
  %383 = vmatpush1.msra.mxu0 0.0
  %384 = vmatprep.subr.mxu0 0.0
  %385 = vmatpush1.msra.mxu0 0.0
  %386 = vmatprep.subr.mxu0 0.0
  %387 = vmatpush1.msra.mxu0 0.0
  %388 = vmatprep.subr.mxu0 0.0
  %389 = vmatpush1.msra.mxu0 0.0
  %390 = vmatprep.subr.mxu0 0.0
  %391 = vmatpush1.msra.mxu0 0.0
  %392 = vmatprep.subr.mxu0 0.0
  %393 = vmatpush1.msra.mxu0 0.0
  %394 = vmatprep.subr.mxu0 0.0
  %395 = vmatpush1.msra.mxu0 0.0
  %396 = vmatprep.subr.mxu0 0.0
  %397 = vmatpush1.msra.mxu0 0.0
  %398 = vmatprep.subr.mxu0 0.0
  %399 = vmatpush1.msra.mxu0 0.0
  %400 = vmatprep.mubr.f32.mxu0 0.0
  %401 = vmatmul.mubr.f32.gmra.mrb[0].mxu0 %v313
  %v402 = vpop.f32.mrb[0].mxu0
  %v403 = vadd.f32 %v334, %v402
  %v404 = vpop.f32.mrb[0].mxu0
  %405 = vdwg.mxu0
  %406 = vst [vmem:[%s3] sm:$0x1] %v403
  // Predicated region
  $region14: #{parallelnet_forward.1} parent=0 // pred_check
    _
  $region15: #{parallelnet_forward.1} parent=0 // pred_check_branch
    %408 = sbr.rel (0) target = $region17
  $region16: #{parallelnet_forward.1} parent=0 // pred_region
    _
  $region17: #{parallelnet_forward.1} parent=0 // pred_fallthru
    _
  // Predicated region
  $region18: #{parallelnet_forward.1} parent=0 // pred_check
    _
  $region19: #{parallelnet_forward.1} parent=0 // pred_check_branch
    %410 = sbr.rel (0) target = $region21
  $region20: #{parallelnet_forward.1} parent=0 // pred_region
    _
  $region21: #{parallelnet_forward.1} parent=0 // pred_fallthru
    _

</llo_original>
